<compile_context>
chip_gen: v7x
topology: tpu7x:2x2x1
jax: 0.10.0
libtpu: 0.0.40
codegen_flags: <defaults>
</compile_context>

<pallas_src>
import functools

import jax
import jax.numpy as jnp
from jax.experimental import pallas as pl
from jax.experimental.pallas import tpu as pltpu


# ---------------------------------------------------------------------------
# Fused single-pass kernel (whole (B_T, C, HW) block resident in VMEM)
# ---------------------------------------------------------------------------
def _fused_kernel(x_ref, w1t_ref, w2t_ref, o_ref):
    x = x_ref[...]                                        # (B_T, C, HW) native dtype
    _, _, hw = x.shape

    # Pooled reductions with f32 accumulation (no full f32 image copy).
    avg = jnp.sum(x, axis=-1, dtype=jnp.float32) * (1.0 / hw)   # (B_T, C)
    mx = jnp.max(x, axis=-1).astype(jnp.float32)                # (B_T, C)

    w1t = w1t_ref[...].astype(jnp.float32)                # (C, C_r)
    w2t = w2t_ref[...].astype(jnp.float32)                # (C_r, C)

    def branch(p):                                        # p: (B_T, C)
        h = jnp.maximum(
            jnp.dot(p, w1t, preferred_element_type=jnp.float32), 0.0)
        return jnp.dot(h, w2t, preferred_element_type=jnp.float32)

    y = jax.nn.sigmoid(branch(avg) + branch(mx))          # (B_T, C) f32
    scale = (1.0 + y).astype(x.dtype)[:, :, None]         # (B_T, C, 1)
    o_ref[...] = x * scale                                # x*y + x == x*(1+y)


def _fused_call(x3, w1_t, w2_t, batch_tile):
    n, c, hw = x3.shape
    itemsize = x3.dtype.itemsize
    c_r = w1_t.shape[1]
    cost = pl.CostEstimate(
        flops=int(n * (3 * c * hw + 8 * c * c_r)),
        transcendentals=int(n * c),
        bytes_accessed=int(2 * n * c * hw * itemsize),
    )
    return pl.pallas_call(
        _fused_kernel,
        out_shape=jax.ShapeDtypeStruct(x3.shape, x3.dtype),
        grid=(n // batch_tile,),
        in_specs=[
            pl.BlockSpec((batch_tile, c, hw), lambda b: (b, 0, 0)),
            pl.BlockSpec(w1_t.shape, lambda b: (0, 0)),
            pl.BlockSpec(w2_t.shape, lambda b: (0, 0)),
        ],
        out_specs=pl.BlockSpec((batch_tile, c, hw), lambda b: (b, 0, 0)),
        compiler_params=pltpu.CompilerParams(
            dimension_semantics=("parallel",)),
        cost_estimate=cost,
    )(x3, w1_t, w2_t)


# ---------------------------------------------------------------------------
# Two-pass path: (1) pooled reductions + FC gate, (2) tiled elementwise scale
# ---------------------------------------------------------------------------
def _make_pool_gate_kernel(hw_total):
    def kernel(x_ref, w1t_ref, w2t_ref, y_ref, sum_acc, max_acc):
        k = pl.program_id(1)
        x = x_ref[...]                                          # (B_T, C, HW_T)
        part_sum = jnp.sum(x, axis=-1, dtype=jnp.float32)       # (B_T, C)
        part_max = jnp.max(x, axis=-1).astype(jnp.float32)      # (B_T, C)

        @pl.when(k == 0)
        def _():
            sum_acc[...] = part_sum
            max_acc[...] = part_max

        @pl.when(k != 0)
        def _():
            sum_acc[...] = sum_acc[...] + part_sum
            max_acc[...] = jnp.maximum(max_acc[...], part_max)

        @pl.when(k == pl.num_programs(1) - 1)
        def _():
            avg = sum_acc[...] * (1.0 / hw_total)
            w1t = w1t_ref[...].astype(jnp.float32)
            w2t = w2t_ref[...].astype(jnp.float32)

            def branch(p):
                h = jnp.maximum(
                    jnp.dot(p, w1t, preferred_element_type=jnp.float32), 0.0)
                return jnp.dot(h, w2t, preferred_element_type=jnp.float32)

            y_ref[...] = jax.nn.sigmoid(branch(avg) + branch(max_acc[...]))

    return kernel


def _pool_gate_call(x3, w1_t, w2_t, batch_tile, hw_tile):
    n, c, hw = x3.shape
    itemsize = x3.dtype.itemsize
    cost = pl.CostEstimate(
        flops=int(n * (2 * c * hw + 8 * c * w1_t.shape[1])),
        transcendentals=int(n * c),
        bytes_accessed=int(n * c * hw * itemsize),
    )
    return pl.pallas_call(
        _make_pool_gate_kernel(hw),
        out_shape=jax.ShapeDtypeStruct((n, c), jnp.float32),
        grid=(n // batch_tile, hw // hw_tile),
        in_specs=[
            pl.BlockSpec((batch_tile, c, hw_tile), lambda b, k: (b, 0, k)),
            pl.BlockSpec(w1_t.shape, lambda b, k: (0, 0)),
            pl.BlockSpec(w2_t.shape, lambda b, k: (0, 0)),
        ],
        out_specs=pl.BlockSpec((batch_tile, c), lambda b, k: (b, 0)),
        scratch_shapes=[
            pltpu.VMEM((batch_tile, c), jnp.float32),   # running sum
            pltpu.VMEM((batch_tile, c), jnp.float32),   # running max
        ],
        compiler_params=pltpu.CompilerParams(
            dimension_semantics=("parallel", "arbitrary")),
        cost_estimate=cost,
    )(x3, w1_t, w2_t)


def _scale_kernel(x_ref, y_ref, o_ref):
    x = x_ref[...]                                         # (B_T, C, HW_T)
    scale = (1.0 + y_ref[...]).astype(x.dtype)[:, :, None]
    o_ref[...] = x * scale


def _scale_call(x3, y, batch_tile, hw_tile):
    n, c, hw = x3.shape
    itemsize = x3.dtype.itemsize
    cost = pl.CostEstimate(
        flops=int(n * c * hw),
        transcendentals=0,
        bytes_accessed=int(2 * n * c * hw * itemsize),
    )
    return pl.pallas_call(
        _scale_kernel,
        out_shape=jax.ShapeDtypeStruct(x3.shape, x3.dtype),
        grid=(n // batch_tile, hw // hw_tile),
        in_specs=[
            pl.BlockSpec((batch_tile, c, hw_tile), lambda b, s: (b, 0, s)),
            pl.BlockSpec((batch_tile, c), lambda b, s: (b, 0)),
        ],
        out_specs=pl.BlockSpec((batch_tile, c, hw_tile), lambda b, s: (b, 0, s)),
        compiler_params=pltpu.CompilerParams(
            dimension_semantics=("parallel", "parallel")),
        cost_estimate=cost,
    )(x3, y)


# ---------------------------------------------------------------------------
# Tile-size helpers
# ---------------------------------------------------------------------------
def _pick_batch_tile(n, unit_bytes, target_bytes):
    best = 1
    for d in range(1, n + 1):
        if n % d == 0 and d * unit_bytes <= target_bytes:
            best = d
    return best


def _pick_hw_tile(hw, row_bytes, target_bytes):
    # Largest multiple of 128 dividing hw whose single-image slab fits target.
    best = None
    cand = 128
    while cand <= hw:
        if hw % cand == 0 and cand * row_bytes <= target_bytes:
            best = cand
        cand += 128
    if best is None:
        best = 128 if hw % 128 == 0 else hw
    return best


# ---------------------------------------------------------------------------
# Public wrapper
# ---------------------------------------------------------------------------
def channel_attention(x, w1, w2, *, block_bytes_target=2 * 1024 * 1024,
                      force_two_pass=False, hw_tile=None):
    """ChannelAttention forward. x: (N, C, H, W); w1: (C//16, C); w2: (C, C//16)."""
    n, c, h, w = x.shape
    hw = h * w
    x3 = x.reshape(n, c, hw)              # free metadata reshape (HW contiguous)
    w1_t = jnp.transpose(w1)              # (C, C_r): pre-transposed for the kernel
    w2_t = jnp.transpose(w2)              # (C_r, C)

    itemsize = x.dtype.itemsize
    img_bytes = c * hw * itemsize

    # TODO(synk): ragged spatial sizes (HW % 128 != 0) that also exceed the VMEM
    # budget fall back to the fused path with a single image per block.
    use_two_pass = force_two_pass or (img_bytes > block_bytes_target
                                      and hw % 128 == 0)

    if use_two_pass:
        if hw_tile is None:
            hw_tile = _pick_hw_tile(hw, c * itemsize, block_bytes_target)
        b_t = _pick_batch_tile(n, hw_tile * c * itemsize, block_bytes_target)
        y = _pool_gate_call(x3, w1_t, w2_t, b_t, hw_tile)     # (N, C) f32
        out3 = _scale_call(x3, y, b_t, hw_tile)
    else:
        b_t = _pick_batch_tile(n, img_bytes, block_bytes_target)
        out3 = _fused_call(x3, w1_t, w2_t, b_t)

    return out3.reshape(n, c, h, w)


# ---------------------------------------------------------------------------
# Pure-JAX reference for correctness checking
# ---------------------------------------------------------------------------
def channel_attention_ref(x, w1, w2):
    xf = x.astype(jnp.float32)
    avg = jnp.mean(xf, axis=(2, 3))                 # (N, C)
    mx = jnp.max(xf, axis=(2, 3))                   # (N, C)

    def branch(p):
        h = jnp.maximum(p @ w1.T.astype(jnp.float32), 0.0)
        return h @ w2.T.astype(jnp.float32)

    y = jax.nn.sigmoid(branch(avg) + branch(mx))    # (N, C)
    y = y[:, :, None, None]
    return (xf * y + xf).astype(x.dtype)


if __name__ == "__main__":
    key = jax.random.PRNGKey(0)
    kx, k1, k2 = jax.random.split(key, 3)

    # in_channels must be >= 16 so that C // 16 >= 1 (as the module requires)
    N, C, H, W = 4, 32, 16, 16
    C_r = C // 16

    x = jax.random.normal(kx, (N, C, H, W), dtype=jnp.float32)
    # Conv2d(in, out, 1, bias=False) weights: (out, in, 1, 1) squeezed to 2D
    w1 = 0.1 * jax.random.normal(k1, (C_r, C), dtype=jnp.float32)   # fc1
    w2 = 0.1 * jax.random.normal(k2, (C, C_r), dtype=jnp.float32)   # fc2

    ref = channel_attention_ref(x, w1, w2)

    # Fused single-pass path (small images, batch-packed blocks)
    out_fused = jax.block_until_ready(channel_attention(x, w1, w2))
    assert out_fused.shape == x.shape and out_fused.dtype == x.dtype
    assert jnp.allclose(out_fused, ref, atol=1e-5, rtol=1e-5), \
        "fused path mismatch vs reference"

    # Two-pass (tiled HW reduction + tiled scale) path, exercised with a
    # small 128-lane HW tile so the accumulator logic runs over 2 steps.
    out_2p = jax.block_until_ready(
        channel_attention(x, w1, w2, force_two_pass=True, hw_tile=128))
    assert out_2p.shape == x.shape and out_2p.dtype == x.dtype
    assert jnp.allclose(out_2p, ref, atol=1e-5, rtol=1e-5), \
        "two-pass path mismatch vs reference"

    print("KERNEL_OK")
</pallas_src>

<mosaic_0001>
module attributes {stable_mosaic.version = 11 : i64} {
  func.func @_fused_kernel(%arg0: i32, %arg1: memref<4x32x256xf32, #tpu.memory_space<vmem>>, %arg2: memref<32x2xf32, #tpu.memory_space<vmem>>, %arg3: memref<2x32xf32, #tpu.memory_space<vmem>>, %arg4: memref<4x32x256xf32, #tpu.memory_space<vmem>>) attributes {dimension_semantics = [#tpu.dimension_semantics<parallel>], iteration_bounds = array<i64: 1>, scalar_prefetch = 0 : i64, scratch_operands = 0 : i64, tpu.core_type = #tpu.core_type<tc>, window_params = [{transform_indices = @transform_0, window_bounds = array<i64: 4, 32, 256>}, {pipeline_mode = #tpu.pipeline_mode<synchronous>, transform_indices = @transform_1, window_bounds = array<i64: 32, 2>}, {pipeline_mode = #tpu.pipeline_mode<synchronous>, transform_indices = @transform_2, window_bounds = array<i64: 2, 32>}, {transform_indices = @transform_3, window_bounds = array<i64: 4, 32, 256>}]} {
    %c0 = arith.constant 0 : index
    %c0_0 = arith.constant 0 : index
    %c0_1 = arith.constant 0 : index
    %0 = vector.load %arg1[%c0, %c0_0, %c0_1] : memref<4x32x256xf32, #tpu.memory_space<vmem>>, vector<4x32x256xf32>
    %cst = arith.constant dense<0.000000e+00> : vector<4x32xf32>
    %1 = vector.multi_reduction <add>, %0, %cst [2] : vector<4x32x256xf32> to vector<4x32xf32>
    %cst_2 = arith.constant 3.906250e-03 : f32
    %2 = vector.broadcast %cst_2 : f32 to vector<4x32xf32>
    %3 = arith.mulf %1, %2 : vector<4x32xf32>
    %cst_3 = arith.constant dense<0xFF800000> : vector<4x32xf32>
    %4 = vector.multi_reduction <maximumf>, %0, %cst_3 [2] : vector<4x32x256xf32> to vector<4x32xf32>
    %c0_4 = arith.constant 0 : index
    %c0_5 = arith.constant 0 : index
    %5 = vector.load %arg2[%c0_4, %c0_5] : memref<32x2xf32, #tpu.memory_space<vmem>>, vector<32x2xf32>
    %c0_6 = arith.constant 0 : index
    %c0_7 = arith.constant 0 : index
    %6 = vector.load %arg3[%c0_6, %c0_7] : memref<2x32xf32, #tpu.memory_space<vmem>>, vector<2x32xf32>
    %cst_8 = arith.constant dense<0.000000e+00> : vector<4x2xf32>
    %7 = tpu.matmul %3, %5, %cst_8 {dimension_numbers = #tpu.dot_dimension_numbers<[1], [0], [0], [1], [0, 0, 1, 1], [], []>} : vector<4x32xf32>, vector<32x2xf32>, vector<4x2xf32> -> vector<4x2xf32>
    %cst_9 = arith.constant 0.000000e+00 : f32
    %8 = vector.broadcast %cst_9 : f32 to vector<4x2xf32>
    %9 = arith.maximumf %7, %8 : vector<4x2xf32>
    %cst_10 = arith.constant dense<0.000000e+00> : vector<4x32xf32>
    %10 = tpu.matmul %9, %6, %cst_10 {dimension_numbers = #tpu.dot_dimension_numbers<[1], [0], [0], [1], [0, 0, 1, 1], [], []>} : vector<4x2xf32>, vector<2x32xf32>, vector<4x32xf32> -> vector<4x32xf32>
    %cst_11 = arith.constant dense<0.000000e+00> : vector<4x2xf32>
    %11 = tpu.matmul %4, %5, %cst_11 {dimension_numbers = #tpu.dot_dimension_numbers<[1], [0], [0], [1], [0, 0, 1, 1], [], []>} : vector<4x32xf32>, vector<32x2xf32>, vector<4x2xf32> -> vector<4x2xf32>
    %cst_12 = arith.constant 0.000000e+00 : f32
    %12 = vector.broadcast %cst_12 : f32 to vector<4x2xf32>
    %13 = arith.maximumf %11, %12 : vector<4x2xf32>
    %cst_13 = arith.constant dense<0.000000e+00> : vector<4x32xf32>
    %14 = tpu.matmul %13, %6, %cst_13 {dimension_numbers = #tpu.dot_dimension_numbers<[1], [0], [0], [1], [0, 0, 1, 1], [], []>} : vector<4x2xf32>, vector<2x32xf32>, vector<4x32xf32> -> vector<4x32xf32>
    %15 = arith.addf %10, %14 : vector<4x32xf32>
    %16 = arith.negf %15 : vector<4x32xf32>
    %17 = math.exp %16 : vector<4x32xf32>
    %cst_14 = arith.constant 1.000000e+00 : f32
    %18 = vector.broadcast %cst_14 : f32 to vector<4x32xf32>
    %19 = arith.addf %18, %17 : vector<4x32xf32>
    %20 = arith.divf %18, %19 : vector<4x32xf32>
    %cst_15 = arith.constant 1.000000e+00 : f32
    %21 = vector.broadcast %cst_15 : f32 to vector<4x32xf32>
    %22 = arith.addf %21, %20 : vector<4x32xf32>
    %23 = vector.shape_cast %22 : vector<4x32xf32> to vector<4x32x1xf32>
    %24 = vector.broadcast %23 : vector<4x32x1xf32> to vector<4x32x256xf32>
    %25 = arith.mulf %0, %24 : vector<4x32x256xf32>
    %c0_16 = arith.constant 0 : index
    %c0_17 = arith.constant 0 : index
    %c0_18 = arith.constant 0 : index
    %26 = vector.load %arg4[%c0_16, %c0_17, %c0_18] : memref<4x32x256xf32, #tpu.memory_space<vmem>>, vector<4x32x256xf32>
    tpu.vector_store %arg4[%c0_16, %c0_17, %c0_18], %25 {strides = array<i32>} : memref<4x32x256xf32, #tpu.memory_space<vmem>>, vector<4x32x256xf32>,
    return
  }
  func.func @transform_0(%arg0: i32) -> (i32, i32, i32) {
    %c0_i32 = arith.constant 0 : i32
    %c0_i32_0 = arith.constant 0 : i32
    %c0_i32_1 = arith.constant 0 : i32
    return %arg0, %c0_i32, %c0_i32_0 : i32, i32, i32
  }
  func.func @transform_1(%arg0: i32) -> (i32, i32) {
    %c0_i32 = arith.constant 0 : i32
    %c0_i32_0 = arith.constant 0 : i32
    %c0_i32_1 = arith.constant 0 : i32
    return %c0_i32, %c0_i32_0 : i32, i32
  }
  func.func @transform_2(%arg0: i32) -> (i32, i32) {
    %c0_i32 = arith.constant 0 : i32
    %c0_i32_0 = arith.constant 0 : i32
    %c0_i32_1 = arith.constant 0 : i32
    return %c0_i32, %c0_i32_0 : i32, i32
  }
  func.func @transform_3(%arg0: i32) -> (i32, i32, i32) {
    %c0_i32 = arith.constant 0 : i32
    %c0_i32_0 = arith.constant 0 : i32
    %c0_i32_1 = arith.constant 0 : i32
    return %arg0, %c0_i32, %c0_i32_0 : i32, i32, i32
  }
}

</mosaic_0001>

<llo_original>
// kernel: tpu_custom_call.1
$region0: #{tpu_custom_call.1}
  #allocation0 [shape = 'u32[]', space=smem, size = 0x4, offset = 0x4, fixed_abs, tag = 'smem constant byte address 0x4 - core index']
  #allocation1 [shape = 'u32[144,128]{1,0:T(1,128)}', space=vmem, size = 0x12000, scoped, tag = 'internal scratch']
  %s0 = inlined_call_operand.hbm [shape: f32[4,32,256], index: 0, kind: input, shape index: {}]
  %s1 = inlined_call_operand.vmem [shape: f32[32,2], index: 1, kind: input, shape index: {}]
  %s2 = inlined_call_operand.vmem [shape: f32[2,32], index: 2, kind: input, shape index: {}]
  %s3 = inlined_call_operand.hbm [shape: f32[4,32,256], index: 3, kind: output, shape index: {}]
  %s4 = sld [smem:[#allocation0]]
  $region26: #{tpu_custom_call.1} parent=0
    _
  %s6 = ssub.s32 1, %s4
  %s7 = scalar_select 0, %s6, %s4
  $region1: #{tpu_custom_call.1} parent=0
    #allocation2 [shape = 'u8[131072]{0}', space=vmem, size = 0x20000, scoped, tag = 'input window, operand 0, single buffered']
    #allocation3 [shape = 's32[1]{0}', space=sflag, size = 0x4, scoped, tag = 'scoped memory for tpu_custom_call.1']
    #allocation4 [shape = 's32[1]{0}', space=sflag, size = 0x4, scoped, tag = 'scoped memory for tpu_custom_call.1']
    #allocation5 [shape = 'u8[131072]{0}', space=vmem, size = 0x20000, scoped, tag = 'output window, operand 0, single buffered']
    %8 = vsyncpa [#allocation3], 0
    %9 = vsyncpa [#allocation4], 0
    // Predicated region
    $region2: #{tpu_custom_call.1} parent=1 // pred_check
      _
    $region3: #{tpu_custom_call.1} parent=1 // pred_check_branch
      %11 = sbr.rel (0) target = $region5
    $region4: #{tpu_custom_call.1} parent=1 // pred_region
      %s13 = ssub.s32 4096, 4096
      %14 = vsyncadd [#allocation3], %s13
      %s15 = sshll.u32 [#allocation2], 4
      %s16 = int_to_ptr.vmem [resolvable:$true] %s15
      %21 = dma.hbm_to_vmem [thread:$0]  %s0, 4096, %s16, [#allocation3], 256, 256, 16
    $region5: #{tpu_custom_call.1} parent=1 // pred_fallthru
      _
    // Predicated region
    $region6: #{tpu_custom_call.1} parent=1 // pred_check
      _
    $region7: #{tpu_custom_call.1} parent=1 // pred_check_branch
      %23 = sbr.rel (0) target = $region9
    $region8: #{tpu_custom_call.1} parent=1 // pred_region
      _
    $region9: #{tpu_custom_call.1} parent=1 // pred_fallthru
      _
    // Predicated region
    $region10: #{tpu_custom_call.1} parent=1 // pred_check
      _
    $region11: #{tpu_custom_call.1} parent=1 // pred_check_branch
      %25 = sbr.rel (0) target = $region13
    $region12: #{tpu_custom_call.1} parent=1 // pred_region
      _
    $region13: #{tpu_custom_call.1} parent=1 // pred_fallthru
      _
    // Predicated region
    $region14: #{tpu_custom_call.1} parent=1 // pred_check
      _
    $region15: #{tpu_custom_call.1} parent=1 // pred_check_branch
      %27 = sbr.rel (0) target = $region17
    $region16: #{tpu_custom_call.1} parent=1 // pred_region
      %28 = dma.done [#allocation3], 4096
    $region17: #{tpu_custom_call.1} parent=1 // pred_fallthru
      _
    %v29 = vld [vmem:[#allocation2] sm:$0xff]
    %v30 = vld [vmem:[#allocation2 + $0x8] sm:$0xff]
    %v31 = vld [vmem:[#allocation2 + $0x10] sm:$0xff]
    %v32 = vld [vmem:[#allocation2 + $0x18] sm:$0xff]
    %v33 = vld [vmem:[#allocation2 + $0x20] sm:$0xff]
    %v34 = vld [vmem:[#allocation2 + $0x28] sm:$0xff]
    %v35 = vld [vmem:[#allocation2 + $0x30] sm:$0xff]
    %v36 = vld [vmem:[#allocation2 + $0x38] sm:$0xff]
    %v37 = vld [vmem:[#allocation2 + $0x40] sm:$0xff]
    %v38 = vld [vmem:[#allocation2 + $0x48] sm:$0xff]
    %v39 = vld [vmem:[#allocation2 + $0x50] sm:$0xff]
    %v40 = vld [vmem:[#allocation2 + $0x58] sm:$0xff]
    %v41 = vld [vmem:[#allocation2 + $0x60] sm:$0xff]
    %v42 = vld [vmem:[#allocation2 + $0x68] sm:$0xff]
    %v43 = vld [vmem:[#allocation2 + $0x70] sm:$0xff]
    %v44 = vld [vmem:[#allocation2 + $0x78] sm:$0xff]
    %v45 = vld [vmem:[#allocation2 + $0x80] sm:$0xff]
    %v46 = vld [vmem:[#allocation2 + $0x88] sm:$0xff]
    %v47 = vld [vmem:[#allocation2 + $0x90] sm:$0xff]
    %v48 = vld [vmem:[#allocation2 + $0x98] sm:$0xff]
    %v49 = vld [vmem:[#allocation2 + $0xa0] sm:$0xff]
    %v50 = vld [vmem:[#allocation2 + $0xa8] sm:$0xff]
    %v51 = vld [vmem:[#allocation2 + $0xb0] sm:$0xff]
    %v52 = vld [vmem:[#allocation2 + $0xb8] sm:$0xff]
    %v53 = vld [vmem:[#allocation2 + $0xc0] sm:$0xff]
    %v54 = vld [vmem:[#allocation2 + $0xc8] sm:$0xff]
    %v55 = vld [vmem:[#allocation2 + $0xd0] sm:$0xff]
    %v56 = vld [vmem:[#allocation2 + $0xd8] sm:$0xff]
    %v57 = vld [vmem:[#allocation2 + $0xe0] sm:$0xff]
    %v58 = vld [vmem:[#allocation2 + $0xe8] sm:$0xff]
    %v59 = vld [vmem:[#allocation2 + $0xf0] sm:$0xff]
    %v60 = vld [vmem:[#allocation2 + $0xf8] sm:$0xff]
    %v61 = vadd.f32 %v29, %v30
    %62 = vadd.xlane.f32.xlu0 %v61
    %v63 = vpop.xlane.xlu0 %62
    %v64 = vadd.f32 %v31, %v32
    %65 = vadd.xlane.f32.xlu0 %v64
    %v66 = vpop.xlane.xlu0 %65
    %v67 = vadd.f32 %v33, %v34
    %68 = vadd.xlane.f32.xlu0 %v67
    %v69 = vpop.xlane.xlu0 %68
    %v70 = vadd.f32 %v35, %v36
    %71 = vadd.xlane.f32.xlu0 %v70
    %v72 = vpop.xlane.xlu0 %71
    %v73 = vadd.f32 %v37, %v38
    %74 = vadd.xlane.f32.xlu0 %v73
    %v75 = vpop.xlane.xlu0 %74
    %v76 = vadd.f32 %v39, %v40
    %77 = vadd.xlane.f32.xlu0 %v76
    %v78 = vpop.xlane.xlu0 %77
    %v79 = vadd.f32 %v41, %v42
    %80 = vadd.xlane.f32.xlu0 %v79
    %v81 = vpop.xlane.xlu0 %80
    %v82 = vadd.f32 %v43, %v44
    %83 = vadd.xlane.f32.xlu0 %v82
    %v84 = vpop.xlane.xlu0 %83
    %v85 = vadd.f32 %v45, %v46
    %86 = vadd.xlane.f32.xlu0 %v85
    %v87 = vpop.xlane.xlu0 %86
    %v88 = vadd.f32 %v47, %v48
    %89 = vadd.xlane.f32.xlu0 %v88
    %v90 = vpop.xlane.xlu0 %89
    %v91 = vadd.f32 %v49, %v50
    %92 = vadd.xlane.f32.xlu0 %v91
    %v93 = vpop.xlane.xlu0 %92
    %v94 = vadd.f32 %v51, %v52
    %95 = vadd.xlane.f32.xlu0 %v94
    %v96 = vpop.xlane.xlu0 %95
    %v97 = vadd.f32 %v53, %v54
    %98 = vadd.xlane.f32.xlu0 %v97
    %v99 = vpop.xlane.xlu0 %98
    %v100 = vadd.f32 %v55, %v56
    %101 = vadd.xlane.f32.xlu0 %v100
    %v102 = vpop.xlane.xlu0 %101
    %v103 = vadd.f32 %v57, %v58
    %104 = vadd.xlane.f32.xlu0 %v103
    %v105 = vpop.xlane.xlu0 %104
    %v106 = vadd.f32 %v59, %v60
    %107 = vadd.xlane.f32.xlu0 %v106
    %v108 = vpop.xlane.xlu0 %107
    %v109 = vmul.f32 %v63, 0.00390625
    %v110 = vmul.f32 %v66, 0.00390625
    %v111 = vmul.f32 %v69, 0.00390625
    %v112 = vmul.f32 %v72, 0.00390625
    %v113 = vmul.f32 %v75, 0.00390625
    %v114 = vmul.f32 %v78, 0.00390625
    %v115 = vmul.f32 %v81, 0.00390625
    %v116 = vmul.f32 %v84, 0.00390625
    %v117 = vmul.f32 %v87, 0.00390625
    %v118 = vmul.f32 %v90, 0.00390625
    %v119 = vmul.f32 %v93, 0.00390625
    %v120 = vmul.f32 %v96, 0.00390625
    %v121 = vmul.f32 %v99, 0.00390625
    %v122 = vmul.f32 %v102, 0.00390625
    %v123 = vmul.f32 %v105, 0.00390625
    %v124 = vmul.f32 %v108, 0.00390625
    %v125 = vmax.f32 %v29, %v30
    %126 = vmax.xlane.f32.xlu0 %v125
    %v127 = vpop.xlane.xlu0 %126
    %v128 = vmax.f32 %v31, %v32
    %129 = vmax.xlane.f32.xlu0 %v128
    %v130 = vpop.xlane.xlu0 %129
    %v131 = vmax.f32 %v33, %v34
    %132 = vmax.xlane.f32.xlu0 %v131
    %v133 = vpop.xlane.xlu0 %132
    %v134 = vmax.f32 %v35, %v36
    %135 = vmax.xlane.f32.xlu0 %v134
    %v136 = vpop.xlane.xlu0 %135
    %v137 = vmax.f32 %v37, %v38
    %138 = vmax.xlane.f32.xlu0 %v137
    %v139 = vpop.xlane.xlu0 %138
    %v140 = vmax.f32 %v39, %v40
    %141 = vmax.xlane.f32.xlu0 %v140
    %v142 = vpop.xlane.xlu0 %141
    %v143 = vmax.f32 %v41, %v42
    %144 = vmax.xlane.f32.xlu0 %v143
    %v145 = vpop.xlane.xlu0 %144
    %v146 = vmax.f32 %v43, %v44
    %147 = vmax.xlane.f32.xlu0 %v146
    %v148 = vpop.xlane.xlu0 %147
    %v149 = vmax.f32 %v45, %v46
    %150 = vmax.xlane.f32.xlu0 %v149
    %v151 = vpop.xlane.xlu0 %150
    %v152 = vmax.f32 %v47, %v48
    %153 = vmax.xlane.f32.xlu0 %v152
    %v154 = vpop.xlane.xlu0 %153
    %v155 = vmax.f32 %v49, %v50
    %156 = vmax.xlane.f32.xlu0 %v155
    %v157 = vpop.xlane.xlu0 %156
    %v158 = vmax.f32 %v51, %v52
    %159 = vmax.xlane.f32.xlu0 %v158
    %v160 = vpop.xlane.xlu0 %159
    %v161 = vmax.f32 %v53, %v54
    %162 = vmax.xlane.f32.xlu0 %v161
    %v163 = vpop.xlane.xlu0 %162
    %v164 = vmax.f32 %v55, %v56
    %165 = vmax.xlane.f32.xlu0 %v164
    %v166 = vpop.xlane.xlu0 %165
    %v167 = vmax.f32 %v57, %v58
    %168 = vmax.xlane.f32.xlu0 %v167
    %v169 = vpop.xlane.xlu0 %168
    %v170 = vmax.f32 %v59, %v60
    %171 = vmax.xlane.f32.xlu0 %v170
    %v172 = vpop.xlane.xlu0 %171
    %v173 = vld [vmem:[%s1] sm:$0xff]
    %v174 = vld [vmem:[%s1 + $0x8] sm:$0xff]
    %v175 = vld [vmem:[%s1 + $0x10] sm:$0xff]
    %v176 = vld [vmem:[%s1 + $0x18] sm:$0xff]
    %v177 = vld [vmem:[%s2] sm:$0x3]
    %v194 = vlaneseq
    %v195 = vand.u32 %v194, 127
    %v196 = vlaneseq
    %v197 = vshrl.u32 %v196, 7
    %v198 = vsub.s32 %v195, %v197
    %v199 = vrot.slane %v109, %v198
    %v200 = vadd.s32 %v195, 4294967288
    %v201 = vlaneseq
    %v202 = vshrl.u32 %v201, 7
    %v203 = vsub.s32 %v200, %v202
    %v204 = vrot.slane %v110, %v203
    %vm205 = vcmask 130112
    %v206 = vsel %vm205, %v204, %v199
    %v207 = vadd.s32 %v195, 4294967280
    %v208 = vlaneseq
    %v209 = vshrl.u32 %v208, 7
    %v210 = vsub.s32 %v207, %v209
    %v211 = vrot.slane %v111, %v210
    %vm212 = vcmask 195712
    %v213 = vsel %vm212, %v211, %v206
    %v214 = vadd.s32 %v195, 4294967272
    %v215 = vlaneseq
    %v216 = vshrl.u32 %v215, 7
    %v217 = vsub.s32 %v214, %v216
    %v218 = vrot.slane %v112, %v217
    %vm219 = vcmask 261312
    %v220 = vsel %vm219, %v218, %v213
    %v221 = vlaneseq
    %v222 = vshrl.u32 %v221, 7
    %v223 = vsub.s32 %v195, %v222
    %v224 = vrot.slane %v113, %v223
    %v225 = vlaneseq
    %v226 = vshrl.u32 %v225, 7
    %v227 = vsub.s32 %v200, %v226
    %v228 = vrot.slane %v114, %v227
    %v229 = vsel %vm205, %v228, %v224
    %v230 = vlaneseq
    %v231 = vshrl.u32 %v230, 7
    %v232 = vsub.s32 %v207, %v231
    %v233 = vrot.slane %v115, %v232
    %v234 = vsel %vm212, %v233, %v229
    %v235 = vlaneseq
    %v236 = vshrl.u32 %v235, 7
    %v237 = vsub.s32 %v214, %v236
    %v238 = vrot.slane %v116, %v237
    %v239 = vsel %vm219, %v238, %v234
    %v240 = vlaneseq
    %v241 = vshrl.u32 %v240, 7
    %v242 = vsub.s32 %v195, %v241
    %v243 = vrot.slane %v117, %v242
    %v244 = vlaneseq
    %v245 = vshrl.u32 %v244, 7
    %v246 = vsub.s32 %v200, %v245
    %v247 = vrot.slane %v118, %v246
    %v248 = vsel %vm205, %v247, %v243
    %v249 = vlaneseq
    %v250 = vshrl.u32 %v249, 7
    %v251 = vsub.s32 %v207, %v250
    %v252 = vrot.slane %v119, %v251
    %v253 = vsel %vm212, %v252, %v248
    %v254 = vlaneseq
    %v255 = vshrl.u32 %v254, 7
    %v256 = vsub.s32 %v214, %v255
    %v257 = vrot.slane %v120, %v256
    %v258 = vsel %vm219, %v257, %v253
    %v259 = vlaneseq
    %v260 = vshrl.u32 %v259, 7
    %v261 = vsub.s32 %v195, %v260
    %v262 = vrot.slane %v121, %v261
    %v263 = vlaneseq
    %v264 = vshrl.u32 %v263, 7
    %v265 = vsub.s32 %v200, %v264
    %v266 = vrot.slane %v122, %v265
    %v267 = vsel %vm205, %v266, %v262
    %v268 = vlaneseq
    %v269 = vshrl.u32 %v268, 7
    %v270 = vsub.s32 %v207, %v269
    %v271 = vrot.slane %v123, %v270
    %v272 = vsel %vm212, %v271, %v267
    %v273 = vlaneseq
    %v274 = vshrl.u32 %v273, 7
    %v275 = vsub.s32 %v214, %v274
    %v276 = vrot.slane %v124, %v275
    %v277 = vsel %vm219, %v276, %v272
    %vm278 = vcmask 1041409
    %v279 = vsel %vm278, %v239, %v220
    %vm280 = vcmask 1042434
    %v281 = vsel %vm280, %v258, %v279
    %vm282 = vcmask 1043459
    %v283 = vsel %vm282, %v277, %v281
    %vm284 = vcmask 261120
    %v285 = vsel %vm284, %v283, 0
    %287 = vmatprep.subr.mxu0 0.0
    %288 = vmatpush1.msra.mxu0 %v173
    %289 = vmatprep.subr.mxu0 0.0
    %290 = vmatpush1.msra.mxu0 %v174
    %291 = vmatprep.subr.mxu0 0.0
    %292 = vmatpush1.msra.mxu0 %v175
    %293 = vmatprep.subr.mxu0 0.0
    %294 = vmatpush1.msra.mxu0 %v176
    %295 = vmatprep.subr.mxu0 0.0
    %296 = vmatpush1.msra.mxu0 0.0
    %297 = vmatprep.subr.mxu0 0.0
    %298 = vmatpush1.msra.mxu0 0.0
    %299 = vmatprep.subr.mxu0 0.0
    %300 = vmatpush1.msra.mxu0 0.0
    %301 = vmatprep.subr.mxu0 0.0
    %302 = vmatpush1.msra.mxu0 0.0
    %303 = vmatprep.subr.mxu0 0.0
    %304 = vmatpush1.msra.mxu0 0.0
    %305 = vmatprep.subr.mxu0 0.0
    %306 = vmatpush1.msra.mxu0 0.0
    %307 = vmatprep.subr.mxu0 0.0
    %308 = vmatpush1.msra.mxu0 0.0
    %309 = vmatprep.subr.mxu0 0.0
    %310 = vmatpush1.msra.mxu0 0.0
    %311 = vmatprep.subr.mxu0 0.0
    %312 = vmatpush1.msra.mxu0 0.0
    %313 = vmatprep.subr.mxu0 0.0
    %314 = vmatpush1.msra.mxu0 0.0
    %315 = vmatprep.subr.mxu0 0.0
    %316 = vmatpush1.msra.mxu0 0.0
    %317 = vmatprep.subr.mxu0 0.0
    %318 = vmatpush1.msra.mxu0 0.0
    %319 = vmatprep.subr.mxu0 0.0
    %320 = vmatpush1.msra.mxu0 0.0
    %321 = vmatprep.subr.mxu0 0.0
    %322 = vmatpush1.msra.mxu0 0.0
    %323 = vmatprep.subr.mxu0 0.0
    %324 = vmatpush1.msra.mxu0 0.0
    %325 = vmatprep.subr.mxu0 0.0
    %326 = vmatpush1.msra.mxu0 0.0
    %327 = vmatprep.subr.mxu0 0.0
    %328 = vmatpush1.msra.mxu0 0.0
    %329 = vmatprep.subr.mxu0 0.0
    %330 = vmatpush1.msra.mxu0 0.0
    %331 = vmatprep.subr.mxu0 0.0
    %332 = vmatpush1.msra.mxu0 0.0
    %333 = vmatprep.subr.mxu0 0.0
    %334 = vmatpush1.msra.mxu0 0.0
    %335 = vmatprep.subr.mxu0 0.0
    %336 = vmatpush1.msra.mxu0 0.0
    %337 = vmatprep.subr.mxu0 0.0
    %338 = vmatpush1.msra.mxu0 0.0
    %339 = vmatprep.subr.mxu0 0.0
    %340 = vmatpush1.msra.mxu0 0.0
    %341 = vmatprep.subr.mxu0 0.0
    %342 = vmatpush1.msra.mxu0 0.0
    %343 = vmatprep.subr.mxu0 0.0
    %344 = vmatpush1.msra.mxu0 0.0
    %345 = vmatprep.subr.mxu0 0.0
    %346 = vmatpush1.msra.mxu0 0.0
    %347 = vmatprep.subr.mxu0 0.0
    %348 = vmatpush1.msra.mxu0 0.0
    %349 = vmatprep.subr.mxu0 0.0
    %350 = vmatpush1.msra.mxu0 0.0
    %351 = vmatprep.mubr.f32.mxu0 0.0
    %352 = vmatmul.mubr.f32.gmra.mrb[0].mxu0 %v285
    %v353 = vpop.f32.mrb[0].mxu0
    %v354 = vadd.f32 0.0, %v353
    %v355 = vpop.f32.mrb[0].mxu0
    %356 = vdwg.mxu0
    %v357 = vmax.f32 %v354, 0.0
    %v374 = vlaneseq
    %v375 = vshrl.u32 %v374, 7
    %v376 = vsub.s32 %v195, %v375
    %v377 = vrot.slane %v127, %v376
    %v378 = vlaneseq
    %v379 = vshrl.u32 %v378, 7
    %v380 = vsub.s32 %v200, %v379
    %v381 = vrot.slane %v130, %v380
    %v382 = vsel %vm205, %v381, %v377
    %v383 = vlaneseq
    %v384 = vshrl.u32 %v383, 7
    %v385 = vsub.s32 %v207, %v384
    %v386 = vrot.slane %v133, %v385
    %v387 = vsel %vm212, %v386, %v382
    %v388 = vlaneseq
    %v389 = vshrl.u32 %v388, 7
    %v390 = vsub.s32 %v214, %v389
    %v391 = vrot.slane %v136, %v390
    %v392 = vsel %vm219, %v391, %v387
    %v393 = vlaneseq
    %v394 = vshrl.u32 %v393, 7
    %v395 = vsub.s32 %v195, %v394
    %v396 = vrot.slane %v139, %v395
    %v397 = vlaneseq
    %v398 = vshrl.u32 %v397, 7
    %v399 = vsub.s32 %v200, %v398
    %v400 = vrot.slane %v142, %v399
    %v401 = vsel %vm205, %v400, %v396
    %v402 = vlaneseq
    %v403 = vshrl.u32 %v402, 7
    %v404 = vsub.s32 %v207, %v403
    %v405 = vrot.slane %v145, %v404
    %v406 = vsel %vm212, %v405, %v401
    %v407 = vlaneseq
    %v408 = vshrl.u32 %v407, 7
    %v409 = vsub.s32 %v214, %v408
    %v410 = vrot.slane %v148, %v409
    %v411 = vsel %vm219, %v410, %v406
    %v412 = vlaneseq
    %v413 = vshrl.u32 %v412, 7
    %v414 = vsub.s32 %v195, %v413
    %v415 = vrot.slane %v151, %v414
    %v416 = vlaneseq
    %v417 = vshrl.u32 %v416, 7
    %v418 = vsub.s32 %v200, %v417
    %v419 = vrot.slane %v154, %v418
    %v420 = vsel %vm205, %v419, %v415
    %v421 = vlaneseq
    %v422 = vshrl.u32 %v421, 7
    %v423 = vsub.s32 %v207, %v422
    %v424 = vrot.slane %v157, %v423
    %v425 = vsel %vm212, %v424, %v420
    %v426 = vlaneseq
    %v427 = vshrl.u32 %v426, 7
    %v428 = vsub.s32 %v214, %v427
    %v429 = vrot.slane %v160, %v428
    %v430 = vsel %vm219, %v429, %v425
    %v431 = vlaneseq
    %v432 = vshrl.u32 %v431, 7
    %v433 = vsub.s32 %v195, %v432
    %v434 = vrot.slane %v163, %v433
    %v435 = vlaneseq
    %v436 = vshrl.u32 %v435, 7
    %v437 = vsub.s32 %v200, %v436
    %v438 = vrot.slane %v166, %v437
    %v439 = vsel %vm205, %v438, %v434
    %v440 = vlaneseq
    %v441 = vshrl.u32 %v440, 7
    %v442 = vsub.s32 %v207, %v441
    %v443 = vrot.slane %v169, %v442
    %v444 = vsel %vm212, %v443, %v439
    %v445 = vlaneseq
    %v446 = vshrl.u32 %v445, 7
    %v447 = vsub.s32 %v214, %v446
    %v448 = vrot.slane %v172, %v447
    %v449 = vsel %vm219, %v448, %v444
    %v450 = vsel %vm278, %v411, %v392
    %v451 = vsel %vm280, %v430, %v450
    %v452 = vsel %vm282, %v449, %v451
    %v453 = vsel %vm284, %v452, 0
    %455 = vmatprep.subr.mxu0 0.0
    %456 = vmatpush1.msra.mxu0 %v173
    %457 = vmatprep.subr.mxu0 0.0
    %458 = vmatpush1.msra.mxu0 %v174
    %459 = vmatprep.subr.mxu0 0.0
    %460 = vmatpush1.msra.mxu0 %v175
    %461 = vmatprep.subr.mxu0 0.0
    %462 = vmatpush1.msra.mxu0 %v176
    %463 = vmatprep.subr.mxu0 0.0
    %464 = vmatpush1.msra.mxu0 0.0
    %465 = vmatprep.subr.mxu0 0.0
    %466 = vmatpush1.msra.mxu0 0.0
    %467 = vmatprep.subr.mxu0 0.0
    %468 = vmatpush1.msra.mxu0 0.0
    %469 = vmatprep.subr.mxu0 0.0
    %470 = vmatpush1.msra.mxu0 0.0
    %471 = vmatprep.subr.mxu0 0.0
    %472 = vmatpush1.msra.mxu0 0.0
    %473 = vmatprep.subr.mxu0 0.0
    %474 = vmatpush1.msra.mxu0 0.0
    %475 = vmatprep.subr.mxu0 0.0
    %476 = vmatpush1.msra.mxu0 0.0
    %477 = vmatprep.subr.mxu0 0.0
    %478 = vmatpush1.msra.mxu0 0.0
    %479 = vmatprep.subr.mxu0 0.0
    %480 = vmatpush1.msra.mxu0 0.0
    %481 = vmatprep.subr.mxu0 0.0
    %482 = vmatpush1.msra.mxu0 0.0
    %483 = vmatprep.subr.mxu0 0.0
    %484 = vmatpush1.msra.mxu0 0.0
    %485 = vmatprep.subr.mxu0 0.0
    %486 = vmatpush1.msra.mxu0 0.0
    %487 = vmatprep.subr.mxu0 0.0
    %488 = vmatpush1.msra.mxu0 0.0
    %489 = vmatprep.subr.mxu0 0.0
    %490 = vmatpush1.msra.mxu0 0.0
    %491 = vmatprep.subr.mxu0 0.0
    %492 = vmatpush1.msra.mxu0 0.0
    %493 = vmatprep.subr.mxu0 0.0
    %494 = vmatpush1.msra.mxu0 0.0
    %495 = vmatprep.subr.mxu0 0.0
    %496 = vmatpush1.msra.mxu0 0.0
    %497 = vmatprep.subr.mxu0 0.0
    %498 = vmatpush1.msra.mxu0 0.0
    %499 = vmatprep.subr.mxu0 0.0
    %500 = vmatpush1.msra.mxu0 0.0
    %501 = vmatprep.subr.mxu0 0.0
    %502 = vmatpush1.msra.mxu0 0.0
    %503 = vmatprep.subr.mxu0 0.0
    %504 = vmatpush1.msra.mxu0 0.0
    %505 = vmatprep.subr.mxu0 0.0
    %506 = vmatpush1.msra.mxu0 0.0
    %507 = vmatprep.subr.mxu0 0.0
    %508 = vmatpush1.msra.mxu0 0.0
    %509 = vmatprep.subr.mxu0 0.0
    %510 = vmatpush1.msra.mxu0 0.0
    %511 = vmatprep.subr.mxu0 0.0
    %512 = vmatpush1.msra.mxu0 0.0
    %513 = vmatprep.subr.mxu0 0.0
    %514 = vmatpush1.msra.mxu0 0.0
    %515 = vmatprep.subr.mxu0 0.0
    %516 = vmatpush1.msra.mxu0 0.0
    %517 = vmatprep.subr.mxu0 0.0
    %518 = vmatpush1.msra.mxu0 0.0
    %519 = vmatprep.mubr.f32.mxu0 0.0
    %520 = vmatmul.mubr.f32.gmra.mrb[0].mxu0 %v453
    %v521 = vpop.f32.mrb[0].mxu0
    %v522 = vadd.f32 0.0, %v521
    %v523 = vpop.f32.mrb[0].mxu0
    %524 = vdwg.mxu0
    %v525 = vmax.f32 %v522, 0.0
    %vm526 = vcmask 15360
    %v528 = vsel %vm526, %v525, 0
    %vm530 = vcmask 1041408
    %v532 = vsel %vm530, %v177, 0
    %534 = vmatprep.subr.mxu0 0.0
    %535 = vmatpush1.msra.mxu0 %v532
    %536 = vmatprep.subr.mxu0 0.0
    %537 = vmatpush1.msra.mxu0 0.0
    %538 = vmatprep.subr.mxu0 0.0
    %539 = vmatpush1.msra.mxu0 0.0
    %540 = vmatprep.subr.mxu0 0.0
    %541 = vmatpush1.msra.mxu0 0.0
    %542 = vmatprep.subr.mxu0 0.0
    %543 = vmatpush1.msra.mxu0 0.0
    %544 = vmatprep.subr.mxu0 0.0
    %545 = vmatpush1.msra.mxu0 0.0
    %546 = vmatprep.subr.mxu0 0.0
    %547 = vmatpush1.msra.mxu0 0.0
    %548 = vmatprep.subr.mxu0 0.0
    %549 = vmatpush1.msra.mxu0 0.0
    %550 = vmatprep.subr.mxu0 0.0
    %551 = vmatpush1.msra.mxu0 0.0
    %552 = vmatprep.subr.mxu0 0.0
    %553 = vmatpush1.msra.mxu0 0.0
    %554 = vmatprep.subr.mxu0 0.0
    %555 = vmatpush1.msra.mxu0 0.0
    %556 = vmatprep.subr.mxu0 0.0
    %557 = vmatpush1.msra.mxu0 0.0
    %558 = vmatprep.subr.mxu0 0.0
    %559 = vmatpush1.msra.mxu0 0.0
    %560 = vmatprep.subr.mxu0 0.0
    %561 = vmatpush1.msra.mxu0 0.0
    %562 = vmatprep.subr.mxu0 0.0
    %563 = vmatpush1.msra.mxu0 0.0
    %564 = vmatprep.subr.mxu0 0.0
    %565 = vmatpush1.msra.mxu0 0.0
    %566 = vmatprep.subr.mxu0 0.0
    %567 = vmatpush1.msra.mxu0 0.0
    %568 = vmatprep.subr.mxu0 0.0
    %569 = vmatpush1.msra.mxu0 0.0
    %570 = vmatprep.subr.mxu0 0.0
    %571 = vmatpush1.msra.mxu0 0.0
    %572 = vmatprep.subr.mxu0 0.0
    %573 = vmatpush1.msra.mxu0 0.0
    %574 = vmatprep.subr.mxu0 0.0
    %575 = vmatpush1.msra.mxu0 0.0
    %576 = vmatprep.subr.mxu0 0.0
    %577 = vmatpush1.msra.mxu0 0.0
    %578 = vmatprep.subr.mxu0 0.0
    %579 = vmatpush1.msra.mxu0 0.0
    %580 = vmatprep.subr.mxu0 0.0
    %581 = vmatpush1.msra.mxu0 0.0
    %582 = vmatprep.subr.mxu0 0.0
    %583 = vmatpush1.msra.mxu0 0.0
    %584 = vmatprep.subr.mxu0 0.0
    %585 = vmatpush1.msra.mxu0 0.0
    %586 = vmatprep.subr.mxu0 0.0
    %587 = vmatpush1.msra.mxu0 0.0
    %588 = vmatprep.subr.mxu0 0.0
    %589 = vmatpush1.msra.mxu0 0.0
    %590 = vmatprep.subr.mxu0 0.0
    %591 = vmatpush1.msra.mxu0 0.0
    %592 = vmatprep.subr.mxu0 0.0
    %593 = vmatpush1.msra.mxu0 0.0
    %594 = vmatprep.subr.mxu0 0.0
    %595 = vmatpush1.msra.mxu0 0.0
    %596 = vmatprep.subr.mxu0 0.0
    %597 = vmatpush1.msra.mxu0 0.0
    %598 = vmatprep.mubr.f32.mxu0 0.0
    %599 = vmatmul.mubr.f32.gmra.mrb[0].mxu0 %v528
    %v600 = vpop.f32.mrb[0].mxu0
    %v601 = vadd.f32 0.0, %v600
    %v602 = vpop.f32.mrb[0].mxu0
    %603 = vdwg.mxu0
    %v605 = vsel %vm526, %v357, 0
    %607 = vmatprep.subr.mxu0 0.0
    %608 = vmatpush1.msra.mxu0 %v532
    %609 = vmatprep.subr.mxu0 0.0
    %610 = vmatpush1.msra.mxu0 0.0
    %611 = vmatprep.subr.mxu0 0.0
    %612 = vmatpush1.msra.mxu0 0.0
    %613 = vmatprep.subr.mxu0 0.0
    %614 = vmatpush1.msra.mxu0 0.0
    %615 = vmatprep.subr.mxu0 0.0
    %616 = vmatpush1.msra.mxu0 0.0
    %617 = vmatprep.subr.mxu0 0.0
    %618 = vmatpush1.msra.mxu0 0.0
    %619 = vmatprep.subr.mxu0 0.0
    %620 = vmatpush1.msra.mxu0 0.0
    %621 = vmatprep.subr.mxu0 0.0
    %622 = vmatpush1.msra.mxu0 0.0
    %623 = vmatprep.subr.mxu0 0.0
    %624 = vmatpush1.msra.mxu0 0.0
    %625 = vmatprep.subr.mxu0 0.0
    %626 = vmatpush1.msra.mxu0 0.0
    %627 = vmatprep.subr.mxu0 0.0
    %628 = vmatpush1.msra.mxu0 0.0
    %629 = vmatprep.subr.mxu0 0.0
    %630 = vmatpush1.msra.mxu0 0.0
    %631 = vmatprep.subr.mxu0 0.0
    %632 = vmatpush1.msra.mxu0 0.0
    %633 = vmatprep.subr.mxu0 0.0
    %634 = vmatpush1.msra.mxu0 0.0
    %635 = vmatprep.subr.mxu0 0.0
    %636 = vmatpush1.msra.mxu0 0.0
    %637 = vmatprep.subr.mxu0 0.0
    %638 = vmatpush1.msra.mxu0 0.0
    %639 = vmatprep.subr.mxu0 0.0
    %640 = vmatpush1.msra.mxu0 0.0
    %641 = vmatprep.subr.mxu0 0.0
    %642 = vmatpush1.msra.mxu0 0.0
    %643 = vmatprep.subr.mxu0 0.0
    %644 = vmatpush1.msra.mxu0 0.0
    %645 = vmatprep.subr.mxu0 0.0
    %646 = vmatpush1.msra.mxu0 0.0
    %647 = vmatprep.subr.mxu0 0.0
    %648 = vmatpush1.msra.mxu0 0.0
    %649 = vmatprep.subr.mxu0 0.0
    %650 = vmatpush1.msra.mxu0 0.0
    %651 = vmatprep.subr.mxu0 0.0
    %652 = vmatpush1.msra.mxu0 0.0
    %653 = vmatprep.subr.mxu0 0.0
    %654 = vmatpush1.msra.mxu0 0.0
    %655 = vmatprep.subr.mxu0 0.0
    %656 = vmatpush1.msra.mxu0 0.0
    %657 = vmatprep.subr.mxu0 0.0
    %658 = vmatpush1.msra.mxu0 0.0
    %659 = vmatprep.subr.mxu0 0.0
    %660 = vmatpush1.msra.mxu0 0.0
    %661 = vmatprep.subr.mxu0 0.0
    %662 = vmatpush1.msra.mxu0 0.0
    %663 = vmatprep.subr.mxu0 0.0
    %664 = vmatpush1.msra.mxu0 0.0
    %665 = vmatprep.subr.mxu0 0.0
    %666 = vmatpush1.msra.mxu0 0.0
    %667 = vmatprep.subr.mxu0 0.0
    %668 = vmatpush1.msra.mxu0 0.0
    %669 = vmatprep.subr.mxu0 0.0
    %670 = vmatpush1.msra.mxu0 0.0
    %671 = vmatprep.mubr.f32.mxu0 0.0
    %672 = vmatmul.mubr.f32.gmra.mrb[0].mxu0 %v605
    %v673 = vpop.f32.mrb[0].mxu0
    %v674 = vadd.f32 %v601, %v673
    %v675 = vpop.f32.mrb[0].mxu0
    %676 = vdwg.mxu0
    %v677 = vxor.u32 %v674, 2147483648
    %v678 = vmul.f32 %v677, 1.442695
    %v679 = vpow.pop %v678
    %v680 = vadd.f32 %v679, 1.0
    %v681 = vrcp.pop %v680
    %v682 = vmul.f32 1.0, %v681
    %v683 = vadd.f32 %v682, 1.0
    %v684 = vlaneseq
    %v685 = vshrl.u32 %v684, 7
    %v686 = vsub.s32 0, %v685
    %v687 = vrot.slane %v683, %v686
    %689 = vbcast.lane.b32.xlu0 %v687, 256
    %v690 = vpop.permute.xlu0 %689
    %s692 = sor.u32 256, 8
    %693 = vbcast.lane.b32.xlu0 %v687, %s692
    %v694 = vpop.permute.xlu0 %693
    %s696 = sor.u32 256, 16
    %697 = vbcast.lane.b32.xlu0 %v687, %s696
    %v698 = vpop.permute.xlu0 %697
    %s700 = sor.u32 256, 24
    %701 = vbcast.lane.b32.xlu0 %v687, %s700
    %v702 = vpop.permute.xlu0 %701
    %v703 = vlaneseq
    %v704 = vshrl.u32 %v703, 7
    %v705 = vsub.s32 1, %v704
    %v706 = vrot.slane %v683, %v705
    %708 = vbcast.lane.b32.xlu0 %v706, 256
    %v709 = vpop.permute.xlu0 %708
    %s711 = sor.u32 256, 8
    %712 = vbcast.lane.b32.xlu0 %v706, %s711
    %v713 = vpop.permute.xlu0 %712
    %s715 = sor.u32 256, 16
    %716 = vbcast.lane.b32.xlu0 %v706, %s715
    %v717 = vpop.permute.xlu0 %716
    %s719 = sor.u32 256, 24
    %720 = vbcast.lane.b32.xlu0 %v706, %s719
    %v721 = vpop.permute.xlu0 %720
    %v722 = vlaneseq
    %v723 = vshrl.u32 %v722, 7
    %v724 = vsub.s32 2, %v723
    %v725 = vrot.slane %v683, %v724
    %727 = vbcast.lane.b32.xlu0 %v725, 256
    %v728 = vpop.permute.xlu0 %727
    %s730 = sor.u32 256, 8
    %731 = vbcast.lane.b32.xlu0 %v725, %s730
    %v732 = vpop.permute.xlu0 %731
    %s734 = sor.u32 256, 16
    %735 = vbcast.lane.b32.xlu0 %v725, %s734
    %v736 = vpop.permute.xlu0 %735
    %s738 = sor.u32 256, 24
    %739 = vbcast.lane.b32.xlu0 %v725, %s738
    %v740 = vpop.permute.xlu0 %739
    %v741 = vlaneseq
    %v742 = vshrl.u32 %v741, 7
    %v743 = vsub.s32 3, %v742
    %v744 = vrot.slane %v683, %v743
    %746 = vbcast.lane.b32.xlu0 %v744, 256
    %v747 = vpop.permute.xlu0 %746
    %s749 = sor.u32 256, 8
    %750 = vbcast.lane.b32.xlu0 %v744, %s749
    %v751 = vpop.permute.xlu0 %750
    %s753 = sor.u32 256, 16
    %754 = vbcast.lane.b32.xlu0 %v744, %s753
    %v755 = vpop.permute.xlu0 %754
    %s757 = sor.u32 256, 24
    %758 = vbcast.lane.b32.xlu0 %v744, %s757
    %v759 = vpop.permute.xlu0 %758
    %v760 = vmul.f32 %v29, %v690
    %v761 = vmul.f32 %v30, %v690
    %v762 = vmul.f32 %v31, %v694
    %v763 = vmul.f32 %v32, %v694
    %v764 = vmul.f32 %v33, %v698
    %v765 = vmul.f32 %v34, %v698
    %v766 = vmul.f32 %v35, %v702
    %v767 = vmul.f32 %v36, %v702
    %v768 = vmul.f32 %v37, %v709
    %v769 = vmul.f32 %v38, %v709
    %v770 = vmul.f32 %v39, %v713
    %v771 = vmul.f32 %v40, %v713
    %v772 = vmul.f32 %v41, %v717
    %v773 = vmul.f32 %v42, %v717
    %v774 = vmul.f32 %v43, %v721
    %v775 = vmul.f32 %v44, %v721
    %v776 = vmul.f32 %v45, %v728
    %v777 = vmul.f32 %v46, %v728
    %v778 = vmul.f32 %v47, %v732
    %v779 = vmul.f32 %v48, %v732
    %v780 = vmul.f32 %v49, %v736
    %v781 = vmul.f32 %v50, %v736
    %v782 = vmul.f32 %v51, %v740
    %v783 = vmul.f32 %v52, %v740
    %v784 = vmul.f32 %v53, %v747
    %v785 = vmul.f32 %v54, %v747
    %v786 = vmul.f32 %v55, %v751
    %v787 = vmul.f32 %v56, %v751
    %v788 = vmul.f32 %v57, %v755
    %v789 = vmul.f32 %v58, %v755
    %v790 = vmul.f32 %v59, %v759
    %v791 = vmul.f32 %v60, %v759
    %792 = vst [vmem:[#allocation5] sm:$0xff] %v760
    %793 = vst [vmem:[#allocation5 + $0x8] sm:$0xff] %v761
    %794 = vst [vmem:[#allocation5 + $0x10] sm:$0xff] %v762
    %795 = vst [vmem:[#allocation5 + $0x18] sm:$0xff] %v763
    %796 = vst [vmem:[#allocation5 + $0x20] sm:$0xff] %v764
    %797 = vst [vmem:[#allocation5 + $0x28] sm:$0xff] %v765
    %798 = vst [vmem:[#allocation5 + $0x30] sm:$0xff] %v766
    %799 = vst [vmem:[#allocation5 + $0x38] sm:$0xff] %v767
    %800 = vst [vmem:[#allocation5 + $0x40] sm:$0xff] %v768
    %801 = vst [vmem:[#allocation5 + $0x48] sm:$0xff] %v769
    %802 = vst [vmem:[#allocation5 + $0x50] sm:$0xff] %v770
    %803 = vst [vmem:[#allocation5 + $0x58] sm:$0xff] %v771
    %804 = vst [vmem:[#allocation5 + $0x60] sm:$0xff] %v772
    %805 = vst [vmem:[#allocation5 + $0x68] sm:$0xff] %v773
    %806 = vst [vmem:[#allocation5 + $0x70] sm:$0xff] %v774
    %807 = vst [vmem:[#allocation5 + $0x78] sm:$0xff] %v775
    %808 = vst [vmem:[#allocation5 + $0x80] sm:$0xff] %v776
    %809 = vst [vmem:[#allocation5 + $0x88] sm:$0xff] %v777
    %810 = vst [vmem:[#allocation5 + $0x90] sm:$0xff] %v778
    %811 = vst [vmem:[#allocation5 + $0x98] sm:$0xff] %v779
    %812 = vst [vmem:[#allocation5 + $0xa0] sm:$0xff] %v780
    %813 = vst [vmem:[#allocation5 + $0xa8] sm:$0xff] %v781
    %814 = vst [vmem:[#allocation5 + $0xb0] sm:$0xff] %v782
    %815 = vst [vmem:[#allocation5 + $0xb8] sm:$0xff] %v783
    %816 = vst [vmem:[#allocation5 + $0xc0] sm:$0xff] %v784
    %817 = vst [vmem:[#allocation5 + $0xc8] sm:$0xff] %v785
    %818 = vst [vmem:[#allocation5 + $0xd0] sm:$0xff] %v786
    %819 = vst [vmem:[#allocation5 + $0xd8] sm:$0xff] %v787
    %820 = vst [vmem:[#allocation5 + $0xe0] sm:$0xff] %v788
    %821 = vst [vmem:[#allocation5 + $0xe8] sm:$0xff] %v789
    %822 = vst [vmem:[#allocation5 + $0xf0] sm:$0xff] %v790
    %823 = vst [vmem:[#allocation5 + $0xf8] sm:$0xff] %v791
    // Predicated region
    $region18: #{tpu_custom_call.1} parent=1 // pred_check
      _
    $region19: #{tpu_custom_call.1} parent=1 // pred_check_branch
      %825 = sbr.rel (0) target = $region21
    $region20: #{tpu_custom_call.1} parent=1 // pred_region
      %s827 = ssub.s32 4096, 4096
      %828 = vsyncadd [#allocation4], %s827
      %s829 = sshll.u32 [#allocation5], 4
      %s830 = int_to_ptr.vmem [resolvable:$true] %s829
      %835 = dma.vmem_to_hbm [thread:$0]  %s830, 4096, %s3, [#allocation4], 256, 256, 16
    $region21: #{tpu_custom_call.1} parent=1 // pred_fallthru
      _
    // Predicated region
    $region22: #{tpu_custom_call.1} parent=1 // pred_check
      _
    $region23: #{tpu_custom_call.1} parent=1 // pred_check_branch
      %837 = sbr.rel (0) target = $region25
    $region24: #{tpu_custom_call.1} parent=1 // pred_region
      %838 = dma.done [#allocation4], 4096
    $region25: #{tpu_custom_call.1} parent=1 // pred_fallthru
      _
    %839 = vsyncpa [#allocation3], 1
    %840 = vsyncpa [#allocation4], 1

</llo_original>
